<compile_context>
chip_gen: v5e
topology: v5e:2x2
jax: 0.10.0
libtpu: 0.0.40
codegen_flags: <defaults>
</compile_context>

<pallas_src>
import jax
import jax.numpy as jnp
from jax.experimental import pallas as pl
from jax.experimental.pallas import tpu as pltpu

MAX_NORM = 1.0   # nn.Embedding(..., max_norm=True) -> max_norm == 1.0
EPS = 1e-7       # torch.embedding_renorm_ epsilon

# Conservative working-set budget: 2 double-buffered copies of (input + output)
# must fit the smallest default scoped VMEM (v5e: 16 MiB) with headroom.
_VMEM_BUDGET_BYTES = 12 * 1024 * 1024


def _add_pe_kernel(x_ref, pe_ref, o_ref):
    # x_ref / o_ref: (row_tile, W) lane-dense slab; pe_ref: (1, W), broadcast over rows.
    o_ref[...] = x_ref[...] + pe_ref[...]


def learned_pose3d_encoding(x, emb_weight):
    """x: (B, S, N, D); emb_weight: (SEQ_LEN_MAX, D).  Returns x + pe broadcast (eval mode)."""
    B, S, N, D = x.shape
    W = S * N * D

    # ---- glue (tiny, O(S*N*D)): max_norm renorm of the looked-up rows, then
    #      pre-broadcast over N and flatten so the kernel sees a lane-dense slab. ----
    pe = emb_weight[:S]                                              # arange(S) lookup
    norm = jnp.sqrt(jnp.sum(pe * pe, axis=-1, keepdims=True))        # (S, 1)
    scale = jnp.where(norm > MAX_NORM, MAX_NORM / (norm + EPS), 1.0)
    pe = (pe * scale).astype(x.dtype)                                # (S, D)
    pe_flat = jnp.broadcast_to(pe[:, None, :], (S, N, D)).reshape(1, W)

    x2 = x.reshape(B, W)

    # ---- row tiling: keep the lane dim at full extent W (satisfies the (8,128)
    #      rule via "equal to full dim"); size the row tile to the VMEM budget. ----
    bytes_per_row = W * x.dtype.itemsize
    max_rows = max(1, _VMEM_BUDGET_BYTES // (4 * bytes_per_row))  # 2 bufs x (in+out)
    if B <= max_rows:
        row_tile = B                       # single block covers everything (demo case)
    else:
        row_tile = max(8, (max_rows // 8) * 8)   # sublane-aligned chunks
    grid_rows = pl.cdiv(B, row_tile)

    out2 = pl.pallas_call(
        _add_pe_kernel,
        out_shape=jax.ShapeDtypeStruct((B, W), x.dtype),
        grid_spec=pltpu.PrefetchScalarGridSpec(
            num_scalar_prefetch=0,
            grid=(grid_rows,),
            in_specs=[
                pl.BlockSpec((row_tile, W), lambda i: (i, 0)),   # lane-dense x slab
                pl.BlockSpec((1, W), lambda i: (0, 0)),          # pre-broadcast pe row
            ],
            out_specs=pl.BlockSpec((row_tile, W), lambda i: (i, 0)),
        ),
        compiler_params=pltpu.CompilerParams(
            dimension_semantics=("parallel",),                   # v7x: shard rows over 2 TCs
        ),
    )(x2, pe_flat)

    return out2.reshape(B, S, N, D)


if __name__ == "__main__":
    key = jax.random.PRNGKey(0)
    B, S, N, D = 2, 8, 5, 32      # batch, seq positions, tokens per position, d_model
    SEQ_LEN_MAX = 16              # embedding table rows (module's seq_len), >= S

    kx, kw = jax.random.split(key)
    x = jax.random.normal(kx, (B, S, N, D), dtype=jnp.float32)
    # nn.Embedding default init: weight ~ N(0, 1)
    emb_weight = jax.random.normal(kw, (SEQ_LEN_MAX, D), dtype=jnp.float32)

    out = learned_pose3d_encoding(x, emb_weight)
    out = jax.block_until_ready(out)

    # pure-JAX reference (eval-mode forward)
    norms = jnp.linalg.norm(emb_weight[:S], axis=-1, keepdims=True)
    scale = jnp.where(norms > MAX_NORM, MAX_NORM / (norms + EPS), 1.0)
    pe_ref = emb_weight[:S] * scale
    ref = x + pe_ref[None, :, None, :]
    assert out.shape == x.shape and out.dtype == x.dtype
    assert jnp.allclose(out, ref, atol=1e-5), "mismatch vs reference"

    print("KERNEL_OK")
</pallas_src>

<mosaic_0001>
module attributes {stable_mosaic.version = 11 : i64} {
  func.func @_add_pe_kernel(%arg0: i32, %arg1: memref<2x1280xf32, #tpu.memory_space<vmem>>, %arg2: memref<1x1280xf32, #tpu.memory_space<vmem>>, %arg3: memref<2x1280xf32, #tpu.memory_space<vmem>>) attributes {dimension_semantics = [#tpu.dimension_semantics<parallel>], iteration_bounds = array<i64: 1>, scalar_prefetch = 0 : i64, scratch_operands = 0 : i64, tpu.core_type = #tpu.core_type<tc>, window_params = [{transform_indices = @transform_0, window_bounds = array<i64: 2, 1280>}, {pipeline_mode = #tpu.pipeline_mode<synchronous>, transform_indices = @transform_1, window_bounds = array<i64: 1, 1280>}, {transform_indices = @transform_2, window_bounds = array<i64: 2, 1280>}]} {
    %c0 = arith.constant 0 : index
    %c0_0 = arith.constant 0 : index
    %0 = vector.load %arg1[%c0, %c0_0] : memref<2x1280xf32, #tpu.memory_space<vmem>>, vector<2x1280xf32>
    %c0_1 = arith.constant 0 : index
    %c0_2 = arith.constant 0 : index
    %1 = vector.load %arg2[%c0_1, %c0_2] : memref<1x1280xf32, #tpu.memory_space<vmem>>, vector<1x1280xf32>
    %2 = vector.broadcast %1 : vector<1x1280xf32> to vector<2x1280xf32>
    %3 = arith.addf %0, %2 : vector<2x1280xf32>
    %c0_3 = arith.constant 0 : index
    %c0_4 = arith.constant 0 : index
    %4 = vector.load %arg3[%c0_3, %c0_4] : memref<2x1280xf32, #tpu.memory_space<vmem>>, vector<2x1280xf32>
    tpu.vector_store %arg3[%c0_3, %c0_4], %3 {strides = array<i32>} : memref<2x1280xf32, #tpu.memory_space<vmem>>, vector<2x1280xf32>,
    return
  }
  func.func @transform_0(%arg0: i32) -> (i32, i32) {
    %c0_i32 = arith.constant 0 : i32
    %c0_i32_0 = arith.constant 0 : i32
    return %arg0, %c0_i32 : i32, i32
  }
  func.func @transform_1(%arg0: i32) -> (i32, i32) {
    %c0_i32 = arith.constant 0 : i32
    %c0_i32_0 = arith.constant 0 : i32
    %c0_i32_1 = arith.constant 0 : i32
    return %c0_i32, %c0_i32_0 : i32, i32
  }
  func.func @transform_2(%arg0: i32) -> (i32, i32) {
    %c0_i32 = arith.constant 0 : i32
    %c0_i32_0 = arith.constant 0 : i32
    return %arg0, %c0_i32 : i32, i32
  }
}

</mosaic_0001>

<llo_original>
// kernel: tpu_custom_call.1
$region0: #{tpu_custom_call.1}
  #allocation0 [shape = 'u32[]', space=smem, size = 0x4, offset = 0x4, fixed_abs, tag = 'smem constant byte address 0x4 - core index']
  #allocation1 [shape = 'u32[72,128]{1,0:T(1,128)}', space=vmem, size = 0x9000, scoped, tag = 'internal scratch']
  %s0 = inlined_call_operand.hbm [shape: f32[2,1280], index: 0, kind: input, shape index: {}]
  %s1 = inlined_call_operand.hbm [shape: f32[1,1280], index: 1, kind: input, shape index: {}]
  %s2 = inlined_call_operand.hbm [shape: f32[2,1280], index: 2, kind: output, shape index: {}]
  %s3 = sld [smem:[#allocation0]]
  $region26: #{tpu_custom_call.1} parent=0
    _
  %s5 = ssub.s32 1, %s3
  %s6 = scalar_select 0, %s5, %s3
  $region1: #{tpu_custom_call.1} parent=0
    #allocation2 [shape = 'u8[10240]{0}', space=vmem, size = 0x2800, scoped, tag = 'input window, operand 0, single buffered']
    #allocation3 [shape = 's32[1]{0}', space=sflag, size = 0x4, scoped, tag = 'scoped memory for tpu_custom_call.1']
    #allocation4 [shape = 's32[1]{0}', space=sflag, size = 0x4, scoped, tag = 'scoped memory for tpu_custom_call.1']
    #allocation5 [shape = 'u8[5120]{0}', space=vmem, size = 0x1400, scoped, tag = 'input window, operand 1, single buffered']
    #allocation6 [shape = 's32[1]{0}', space=sflag, size = 0x4, scoped, tag = 'scoped memory for tpu_custom_call.1']
    #allocation7 [shape = 'u8[10240]{0}', space=vmem, size = 0x2800, scoped, tag = 'output window, operand 0, single buffered']
    %7 = vsyncpa [#allocation3], 0
    %8 = vsyncpa [#allocation6], 0
    %9 = vsyncpa [#allocation4], 0
    // Predicated region
    $region2: #{tpu_custom_call.1} parent=1 // pred_check
      _
    $region3: #{tpu_custom_call.1} parent=1 // pred_check_branch
      %11 = sbr.rel (0) target = $region5
    $region4: #{tpu_custom_call.1} parent=1 // pred_region
      %13 = vsyncadd [#allocation3], 0
      %s15 = sshll.u32 %s0, 4
      %s16 = int_to_ptr.hbm [resolvable:$true] %s15
      %s17 = sshll.u32 [#allocation2], 4
      %s18 = int_to_ptr.vmem [resolvable:$true] %s17
      %20 = dma.hbm_to_vmem [thread:$0]  %s16, 320, %s18, [#allocation3]
    $region5: #{tpu_custom_call.1} parent=1 // pred_fallthru
      _
    // Predicated region
    $region6: #{tpu_custom_call.1} parent=1 // pred_check
      _
    $region7: #{tpu_custom_call.1} parent=1 // pred_check_branch
      %22 = sbr.rel (0) target = $region9
    $region8: #{tpu_custom_call.1} parent=1 // pred_region
      %24 = vsyncadd [#allocation6], 0
      %s26 = sshll.u32 %s1, 4
      %s27 = int_to_ptr.hbm [resolvable:$true] %s26
      %s28 = sshll.u32 [#allocation5], 4
      %s29 = int_to_ptr.vmem [resolvable:$true] %s28
      %31 = dma.hbm_to_vmem [thread:$0]  %s27, 160, %s29, [#allocation6]
    $region9: #{tpu_custom_call.1} parent=1 // pred_fallthru
      _
    // Predicated region
    $region10: #{tpu_custom_call.1} parent=1 // pred_check
      _
    $region11: #{tpu_custom_call.1} parent=1 // pred_check_branch
      %33 = sbr.rel (0) target = $region13
    $region12: #{tpu_custom_call.1} parent=1 // pred_region
      %35 = dma.done [#allocation3], 320
    $region13: #{tpu_custom_call.1} parent=1 // pred_fallthru
      _
    // Predicated region
    $region14: #{tpu_custom_call.1} parent=1 // pred_check
      _
    $region15: #{tpu_custom_call.1} parent=1 // pred_check_branch
      %37 = sbr.rel (0) target = $region17
    $region16: #{tpu_custom_call.1} parent=1 // pred_region
      %39 = dma.done [#allocation6], 160
    $region17: #{tpu_custom_call.1} parent=1 // pred_fallthru
      _
    %v40 = vld [vmem:[#allocation2] sm:$0xff]
    %v41 = vld [vmem:[#allocation2 + $0x8] sm:$0xff]
    %v42 = vld [vmem:[#allocation2 + $0x10] sm:$0xf]
    %v43 = vld [vmem:[#allocation5] sm:$0xff]
    %v44 = vld [vmem:[#allocation5 + $0x8] sm:$0x3]
    %v47 = vperm.slane %v43, 0
    %v48 = vperm.slane %v43, 1
    %v49 = vperm.slane %v43, 2
    %v50 = vperm.slane %v43, 3
    %v51 = vperm.slane %v43, 4
    %v52 = vperm.slane %v43, 5
    %v53 = vperm.slane %v43, 6
    %v54 = vperm.slane %v43, 7
    %v55 = vperm.slane %v44, 0
    %v56 = vperm.slane %v44, 1
    %v57 = vrot.slane %v48, 6
    %v58 = vrot.slane %v49, 4
    %v59 = vrot.slane %v50, 2
    %v60 = vrot.slane %v52, 6
    %v61 = vrot.slane %v53, 4
    %v62 = vrot.slane %v54, 2
    %v63 = vrot.slane %v56, 6
    %vm64 = vcmask 1041408
    %v65 = vsel %vm64, %v47, %v57
    %vm66 = vcmask 1045508
    %v67 = vsel %vm66, %v58, %v59
    %vm68 = vcmask 1043456
    %v69 = vsel %vm68, %v65, %v67
    %v70 = vsel %vm64, %v51, %v60
    %v71 = vsel %vm66, %v61, %v62
    %v72 = vsel %vm68, %v70, %v71
    %v73 = vsel %vm64, %v55, %v63
    %v77 = vadd.f32 %v40, %v69
    %v78 = vadd.f32 %v41, %v72
    %v79 = vadd.f32 %v42, %v73
    %80 = vst [vmem:[#allocation7] sm:$0xff] %v77
    %81 = vst [vmem:[#allocation7 + $0x8] sm:$0xff] %v78
    %82 = vst [vmem:[#allocation7 + $0x10] sm:$0xf] %v79
    // Predicated region
    $region18: #{tpu_custom_call.1} parent=1 // pred_check
      _
    $region19: #{tpu_custom_call.1} parent=1 // pred_check_branch
      %84 = sbr.rel (0) target = $region21
    $region20: #{tpu_custom_call.1} parent=1 // pred_region
      %86 = vsyncadd [#allocation4], 0
      %s88 = sshll.u32 [#allocation7], 4
      %s89 = int_to_ptr.vmem [resolvable:$true] %s88
      %s90 = sshll.u32 %s2, 4
      %s91 = int_to_ptr.hbm [resolvable:$true] %s90
      %93 = dma.vmem_to_hbm [thread:$0]  %s89, 320, %s91, [#allocation4]
    $region21: #{tpu_custom_call.1} parent=1 // pred_fallthru
      _
    // Predicated region
    $region22: #{tpu_custom_call.1} parent=1 // pred_check
      _
    $region23: #{tpu_custom_call.1} parent=1 // pred_check_branch
      %95 = sbr.rel (0) target = $region25
    $region24: #{tpu_custom_call.1} parent=1 // pred_region
      %97 = dma.done [#allocation4], 320
    $region25: #{tpu_custom_call.1} parent=1 // pred_fallthru
      _
    %98 = vsyncpa [#allocation3], 1
    %99 = vsyncpa [#allocation6], 1
    %100 = vsyncpa [#allocation4], 1

</llo_original>
